<compile_context>
chip_gen: v7x
topology: tpu7x:2x2x1
jax: 0.10.0
libtpu: 0.0.40
codegen_flags: <defaults>
</compile_context>

<pallas_src>
import functools

import jax
import jax.numpy as jnp
from jax.experimental import pallas as pl
from jax.experimental.pallas import tpu as pltpu

LANES = 128
OUT_LANES = 8          # label logits in lanes [:2], domain logits in [2:6]
DEFAULT_TB = 256       # batch tile (review: 256-512 sweet spot on v6e/v7x)


def _round_up(n, m):
    return (n + m - 1) // m * m


def _silu(x):
    # x * sigmoid(x); sigmoid lowers to the EUP transcendental path (f32).
    return x * jax.nn.sigmoid(x)


def _dann_kernel(x_ref, w_ref, b_ref, out_ref, *, input_dim, p1):
    """Fused DANN forward for one (TB, input_dim) batch tile.

    x_ref   : (TB, input_dim) f32 input tile
    w_ref   : (p1 + 640, 128) bf16 packed weights (resident across grid steps)
    b_ref   : (8, 128)        f32 packed biases  (rows 0..5 used)
    out_ref : (TB, 8)         f32: label = lanes [:2], domain = lanes [2:6]
    """
    f32 = jnp.float32
    bf16 = jnp.bfloat16
    b = b_ref[...]

    # Static, 16-row-aligned offsets into the packed bf16 weight slab.
    p2 = p1 + 128
    p3 = p2 + 128
    p4 = p3 + 128
    p5 = p4 + 128
    p6 = p5 + 128

    x = x_ref[...].astype(bf16)

    # ---- feature extractor: input_dim -> 128 -> 64 -> 32 (kept at 128 lanes;
    # padded lanes stay exactly 0: zero pad weights/biases and SiLU(0)=0) ----
    h = _silu(jnp.dot(x, w_ref[:input_dim, :], preferred_element_type=f32) + b[0:1, :])
    h = _silu(jnp.dot(h.astype(bf16), w_ref[p1:p2, :], preferred_element_type=f32) + b[1:2, :])
    h = _silu(jnp.dot(h.astype(bf16), w_ref[p2:p3, :], preferred_element_type=f32) + b[2:3, :])

    # ---- fused class + domain heads (gradient reversal == identity fwd) ----
    # after head L1: lanes [:16] = class path, [16:32] = domain path
    # after head L2: lanes [:8]  = class path, [8:16]  = domain path
    # after head L3: lanes [:2]  = label logits, [2:6] = domain logits
    g = _silu(jnp.dot(h.astype(bf16), w_ref[p3:p4, :], preferred_element_type=f32) + b[3:4, :])
    g = _silu(jnp.dot(g.astype(bf16), w_ref[p4:p5, :], preferred_element_type=f32) + b[4:5, :])
    logits = jnp.dot(g.astype(bf16), w_ref[p5:p6, :], preferred_element_type=f32) + b[5:6, :]

    out_ref[...] = logits[:, :OUT_LANES].astype(out_ref.dtype)


def init_params(key, input_dim):
    """Deterministic, PyTorch-Linear-like init. Weights stored as (in, out), f32."""
    dims_feature = [(input_dim, 128), (128, 64), (64, 32)]
    dims_class = [(32, 16), (16, 8), (8, 2)]
    dims_domain = [(32, 16), (16, 8), (8, 4)]

    params = []
    for (d_in, d_out) in dims_feature + dims_class + dims_domain:
        key, kw, kb = jax.random.split(key, 3)
        bound = 1.0 / jnp.sqrt(d_in)
        w = jax.random.uniform(kw, (d_in, d_out), jnp.float32, -bound, bound)
        b = jax.random.uniform(kb, (1, d_out), jnp.float32, -bound, bound)
        params += [w, b]
    return params  # 18 arrays: w1,b1,...,dw3,db3


def pack_params(params, input_dim):
    """Pack the 18 parameter tensors into one bf16 weight slab + one f32 bias slab."""
    (w1, b1, w2, b2, w3, b3,
     cw1, cb1, cw2, cb2, cw3, cb3,
     dw1, db1, dw2, db2, dw3, db3) = params
    # 16-row alignment so every block offset is bf16-subtile (16,128) aligned.
    p1 = _round_up(input_dim, 16)

    def blk(rows):
        return jnp.zeros((rows, LANES), jnp.float32)

    w1b = blk(p1).at[:input_dim, :128].set(w1)            # fc1
    w2b = blk(128).at[:128, :64].set(w2)                  # fc2
    w3b = blk(128).at[:64, :32].set(w3)                   # fc3
    # fused head layer 1: class weights in lanes [:16], domain in [16:32]
    h1b = blk(128).at[:32, :16].set(cw1).at[:32, 16:32].set(dw1)
    # fused head layer 2: block-diagonal
    h2b = blk(128).at[:16, :8].set(cw2).at[16:32, 8:16].set(dw2)
    # fused head layer 3: block-diagonal (label lanes [:2], domain lanes [2:6])
    h3b = blk(128).at[:8, :2].set(cw3).at[8:16, 2:6].set(dw3)
    w_slab = jnp.concatenate([w1b, w2b, w3b, h1b, h2b, h3b], axis=0).astype(jnp.bfloat16)

    b_slab = jnp.zeros((8, LANES), jnp.float32)
    b_slab = b_slab.at[0, :128].set(b1.reshape(-1))
    b_slab = b_slab.at[1, :64].set(b2.reshape(-1))
    b_slab = b_slab.at[2, :32].set(b3.reshape(-1))
    b_slab = b_slab.at[3, :16].set(cb1.reshape(-1))
    b_slab = b_slab.at[3, 16:32].set(db1.reshape(-1))
    b_slab = b_slab.at[4, :8].set(cb2.reshape(-1))
    b_slab = b_slab.at[4, 8:16].set(db2.reshape(-1))
    b_slab = b_slab.at[5, :2].set(cb3.reshape(-1))
    b_slab = b_slab.at[5, 2:6].set(db3.reshape(-1))
    return w_slab, b_slab


@jax.jit
def dann_forward(x, alpha, w_slab, b_slab):
    # alpha only affects the backward pass of GradientReversal; the forward
    # output is independent of it, so it is intentionally unused here.
    del alpha
    B, input_dim = x.shape
    w_rows = w_slab.shape[0]
    p1 = w_rows - 5 * 128  # = round_up(input_dim, 16)

    # Batch tile: 256 rows (fills MXU M dim on v6e/v7x); shrink for tiny B.
    TB = min(DEFAULT_TB, _round_up(B, 8))
    B_pad = _round_up(B, TB)
    if B_pad != B:
        # Ragged tail only; zero rows flow through harmlessly and are sliced off.
        x = jnp.pad(x, ((0, B_pad - B), (0, 0)))
    grid = (B_pad // TB,)

    cost = pl.CostEstimate(
        flops=int(2 * B_pad * LANES * (input_dim + 5 * 128)),
        transcendentals=int(5 * B_pad * LANES),
        bytes_accessed=int(B_pad * input_dim * 4 + w_slab.size * 2
                           + b_slab.size * 4 + B_pad * OUT_LANES * 4),
    )

    out = pl.pallas_call(
        functools.partial(_dann_kernel, input_dim=input_dim, p1=p1),
        out_shape=jax.ShapeDtypeStruct((B_pad, OUT_LANES), jnp.float32),
        grid_spec=pltpu.PrefetchScalarGridSpec(
            num_scalar_prefetch=0,
            grid=grid,
            in_specs=[
                pl.BlockSpec((TB, input_dim), lambda i: (i, 0)),     # x tile
                pl.BlockSpec((w_rows, LANES), lambda i: (0, 0)),     # resident weights
                pl.BlockSpec((8, LANES), lambda i: (0, 0)),          # resident biases
            ],
            out_specs=pl.BlockSpec((TB, OUT_LANES), lambda i: (i, 0)),
        ),
        compiler_params=pltpu.CompilerParams(
            dimension_semantics=("parallel",)),
        cost_estimate=cost,
    )(x, w_slab, b_slab)

    return out[:B, :2], out[:B, 2:6]


def dann_forward_ref(x, alpha, *params):
    """Pure-JAX f32 reference (unpacked params) for correctness checking."""
    del alpha
    (w1, b1, w2, b2, w3, b3,
     cw1, cb1, cw2, cb2, cw3, cb3,
     dw1, db1, dw2, db2, dw3, db3) = params

    def silu(v):
        return v * jax.nn.sigmoid(v)

    h = silu(x @ w1 + b1)
    h = silu(h @ w2 + b2)
    feat = silu(h @ w3 + b3)

    c = silu(feat @ cw1 + cb1)
    c = silu(c @ cw2 + cb2)
    label = c @ cw3 + cb3

    d = silu(feat @ dw1 + db1)
    d = silu(d @ dw2 + db2)
    domain = d @ dw3 + db3
    return label, domain


if __name__ == "__main__":
    key = jax.random.PRNGKey(0)
    key_x, key_x2, key_p = jax.random.split(key, 3)

    input_dim = 16
    alpha = jnp.float32(0.5)

    params = init_params(key_p, input_dim)
    w_slab, b_slab = pack_params(params, input_dim)

    # ---- small batch: single grid step ----
    batch = 8
    x = jax.random.normal(key_x, (batch, input_dim), dtype=jnp.float32)
    label, domain = dann_forward(x, alpha, w_slab, b_slab)
    label, domain = jax.block_until_ready((label, domain))

    label_ref, domain_ref = dann_forward_ref(x, alpha, *params)
    assert label.shape == (batch, 2) and domain.shape == (batch, 4)
    # bf16 MXU inputs -> relaxed tolerance vs. the f32 reference.
    assert jnp.allclose(label, label_ref, atol=5e-2, rtol=5e-2)
    assert jnp.allclose(domain, domain_ref, atol=5e-2, rtol=5e-2)

    # ---- larger batch: exercises multi-step grid + ragged-tail padding ----
    batch2 = 264
    x2 = jax.random.normal(key_x2, (batch2, input_dim), dtype=jnp.float32)
    label2, domain2 = dann_forward(x2, alpha, w_slab, b_slab)
    label2, domain2 = jax.block_until_ready((label2, domain2))

    label2_ref, domain2_ref = dann_forward_ref(x2, alpha, *params)
    assert label2.shape == (batch2, 2) and domain2.shape == (batch2, 4)
    assert jnp.allclose(label2, label2_ref, atol=5e-2, rtol=5e-2)
    assert jnp.allclose(domain2, domain2_ref, atol=5e-2, rtol=5e-2)

    print("KERNEL_OK")
</pallas_src>

<mosaic_0001>
module attributes {stable_mosaic.version = 11 : i64} {
  func.func @_dann_kernel(%arg0: i32, %arg1: memref<8x16xf32, #tpu.memory_space<vmem>>, %arg2: memref<656x128xbf16, #tpu.memory_space<vmem>>, %arg3: memref<8x128xf32, #tpu.memory_space<vmem>>, %arg4: memref<8x8xf32, #tpu.memory_space<vmem>>) attributes {dimension_semantics = [#tpu.dimension_semantics<parallel>], iteration_bounds = array<i64: 1>, scalar_prefetch = 0 : i64, scratch_operands = 0 : i64, tpu.core_type = #tpu.core_type<tc>, window_params = [{transform_indices = @transform_0, window_bounds = array<i64: 8, 16>}, {pipeline_mode = #tpu.pipeline_mode<synchronous>, transform_indices = @transform_1, window_bounds = array<i64: 656, 128>}, {pipeline_mode = #tpu.pipeline_mode<synchronous>, transform_indices = @transform_2, window_bounds = array<i64: 8, 128>}, {transform_indices = @transform_3, window_bounds = array<i64: 8, 8>}]} {
    %c0 = arith.constant 0 : index
    %c0_0 = arith.constant 0 : index
    %0 = vector.load %arg3[%c0, %c0_0] : memref<8x128xf32, #tpu.memory_space<vmem>>, vector<8x128xf32>
    %c0_1 = arith.constant 0 : index
    %c0_2 = arith.constant 0 : index
    %1 = vector.load %arg1[%c0_1, %c0_2] : memref<8x16xf32, #tpu.memory_space<vmem>>, vector<8x16xf32>
    %2 = arith.truncf %1 : vector<8x16xf32> to vector<8x16xbf16>
    %c0_3 = arith.constant 0 : index
    %c0_4 = arith.constant 0 : index
    %3 = vector.load %arg2[%c0_3, %c0_4] : memref<656x128xbf16, #tpu.memory_space<vmem>>, vector<16x128xbf16>
    %cst = arith.constant dense<0.000000e+00> : vector<8x128xf32>
    %4 = tpu.matmul %2, %3, %cst {dimension_numbers = #tpu.dot_dimension_numbers<[1], [0], [0], [1], [0, 0, 1, 1], [], []>} : vector<8x16xbf16>, vector<16x128xbf16>, vector<8x128xf32> -> vector<8x128xf32>
    %5 = vector.extract_strided_slice %0 {offsets = [0, 0], sizes = [1, 128], strides = [1, 1]} : vector<8x128xf32> to vector<1x128xf32>
    %6 = vector.broadcast %5 : vector<1x128xf32> to vector<8x128xf32>
    %7 = arith.addf %4, %6 : vector<8x128xf32>
    %8 = arith.negf %7 : vector<8x128xf32>
    %9 = math.exp %8 : vector<8x128xf32>
    %cst_5 = arith.constant 1.000000e+00 : f32
    %10 = vector.broadcast %cst_5 : f32 to vector<8x128xf32>
    %11 = arith.addf %10, %9 : vector<8x128xf32>
    %12 = arith.divf %10, %11 : vector<8x128xf32>
    %13 = arith.mulf %7, %12 : vector<8x128xf32>
    %14 = arith.truncf %13 : vector<8x128xf32> to vector<8x128xbf16>
    %c16 = arith.constant 16 : index
    %c0_6 = arith.constant 0 : index
    %15 = vector.load %arg2[%c16, %c0_6] : memref<656x128xbf16, #tpu.memory_space<vmem>>, vector<128x128xbf16>
    %cst_7 = arith.constant dense<0.000000e+00> : vector<8x128xf32>
    %16 = tpu.matmul %14, %15, %cst_7 {dimension_numbers = #tpu.dot_dimension_numbers<[1], [0], [0], [1], [0, 0, 1, 1], [], []>} : vector<8x128xbf16>, vector<128x128xbf16>, vector<8x128xf32> -> vector<8x128xf32>
    %17 = vector.extract_strided_slice %0 {offsets = [1, 0], sizes = [1, 128], strides = [1, 1]} : vector<8x128xf32> to vector<1x128xf32>
    %18 = vector.broadcast %17 : vector<1x128xf32> to vector<8x128xf32>
    %19 = arith.addf %16, %18 : vector<8x128xf32>
    %20 = arith.negf %19 : vector<8x128xf32>
    %21 = math.exp %20 : vector<8x128xf32>
    %cst_8 = arith.constant 1.000000e+00 : f32
    %22 = vector.broadcast %cst_8 : f32 to vector<8x128xf32>
    %23 = arith.addf %22, %21 : vector<8x128xf32>
    %24 = arith.divf %22, %23 : vector<8x128xf32>
    %25 = arith.mulf %19, %24 : vector<8x128xf32>
    %26 = arith.truncf %25 : vector<8x128xf32> to vector<8x128xbf16>
    %c144 = arith.constant 144 : index
    %c0_9 = arith.constant 0 : index
    %27 = vector.load %arg2[%c144, %c0_9] : memref<656x128xbf16, #tpu.memory_space<vmem>>, vector<128x128xbf16>
    %cst_10 = arith.constant dense<0.000000e+00> : vector<8x128xf32>
    %28 = tpu.matmul %26, %27, %cst_10 {dimension_numbers = #tpu.dot_dimension_numbers<[1], [0], [0], [1], [0, 0, 1, 1], [], []>} : vector<8x128xbf16>, vector<128x128xbf16>, vector<8x128xf32> -> vector<8x128xf32>
    %29 = vector.extract_strided_slice %0 {offsets = [2, 0], sizes = [1, 128], strides = [1, 1]} : vector<8x128xf32> to vector<1x128xf32>
    %30 = vector.broadcast %29 : vector<1x128xf32> to vector<8x128xf32>
    %31 = arith.addf %28, %30 : vector<8x128xf32>
    %32 = arith.negf %31 : vector<8x128xf32>
    %33 = math.exp %32 : vector<8x128xf32>
    %cst_11 = arith.constant 1.000000e+00 : f32
    %34 = vector.broadcast %cst_11 : f32 to vector<8x128xf32>
    %35 = arith.addf %34, %33 : vector<8x128xf32>
    %36 = arith.divf %34, %35 : vector<8x128xf32>
    %37 = arith.mulf %31, %36 : vector<8x128xf32>
    %38 = arith.truncf %37 : vector<8x128xf32> to vector<8x128xbf16>
    %c272 = arith.constant 272 : index
    %c0_12 = arith.constant 0 : index
    %39 = vector.load %arg2[%c272, %c0_12] : memref<656x128xbf16, #tpu.memory_space<vmem>>, vector<128x128xbf16>
    %cst_13 = arith.constant dense<0.000000e+00> : vector<8x128xf32>
    %40 = tpu.matmul %38, %39, %cst_13 {dimension_numbers = #tpu.dot_dimension_numbers<[1], [0], [0], [1], [0, 0, 1, 1], [], []>} : vector<8x128xbf16>, vector<128x128xbf16>, vector<8x128xf32> -> vector<8x128xf32>
    %41 = vector.extract_strided_slice %0 {offsets = [3, 0], sizes = [1, 128], strides = [1, 1]} : vector<8x128xf32> to vector<1x128xf32>
    %42 = vector.broadcast %41 : vector<1x128xf32> to vector<8x128xf32>
    %43 = arith.addf %40, %42 : vector<8x128xf32>
    %44 = arith.negf %43 : vector<8x128xf32>
    %45 = math.exp %44 : vector<8x128xf32>
    %cst_14 = arith.constant 1.000000e+00 : f32
    %46 = vector.broadcast %cst_14 : f32 to vector<8x128xf32>
    %47 = arith.addf %46, %45 : vector<8x128xf32>
    %48 = arith.divf %46, %47 : vector<8x128xf32>
    %49 = arith.mulf %43, %48 : vector<8x128xf32>
    %50 = arith.truncf %49 : vector<8x128xf32> to vector<8x128xbf16>
    %c400 = arith.constant 400 : index
    %c0_15 = arith.constant 0 : index
    %51 = vector.load %arg2[%c400, %c0_15] : memref<656x128xbf16, #tpu.memory_space<vmem>>, vector<128x128xbf16>
    %cst_16 = arith.constant dense<0.000000e+00> : vector<8x128xf32>
    %52 = tpu.matmul %50, %51, %cst_16 {dimension_numbers = #tpu.dot_dimension_numbers<[1], [0], [0], [1], [0, 0, 1, 1], [], []>} : vector<8x128xbf16>, vector<128x128xbf16>, vector<8x128xf32> -> vector<8x128xf32>
    %53 = vector.extract_strided_slice %0 {offsets = [4, 0], sizes = [1, 128], strides = [1, 1]} : vector<8x128xf32> to vector<1x128xf32>
    %54 = vector.broadcast %53 : vector<1x128xf32> to vector<8x128xf32>
    %55 = arith.addf %52, %54 : vector<8x128xf32>
    %56 = arith.negf %55 : vector<8x128xf32>
    %57 = math.exp %56 : vector<8x128xf32>
    %cst_17 = arith.constant 1.000000e+00 : f32
    %58 = vector.broadcast %cst_17 : f32 to vector<8x128xf32>
    %59 = arith.addf %58, %57 : vector<8x128xf32>
    %60 = arith.divf %58, %59 : vector<8x128xf32>
    %61 = arith.mulf %55, %60 : vector<8x128xf32>
    %62 = arith.truncf %61 : vector<8x128xf32> to vector<8x128xbf16>
    %c528 = arith.constant 528 : index
    %c0_18 = arith.constant 0 : index
    %63 = vector.load %arg2[%c528, %c0_18] : memref<656x128xbf16, #tpu.memory_space<vmem>>, vector<128x128xbf16>
    %cst_19 = arith.constant dense<0.000000e+00> : vector<8x128xf32>
    %64 = tpu.matmul %62, %63, %cst_19 {dimension_numbers = #tpu.dot_dimension_numbers<[1], [0], [0], [1], [0, 0, 1, 1], [], []>} : vector<8x128xbf16>, vector<128x128xbf16>, vector<8x128xf32> -> vector<8x128xf32>
    %65 = vector.extract_strided_slice %0 {offsets = [5, 0], sizes = [1, 128], strides = [1, 1]} : vector<8x128xf32> to vector<1x128xf32>
    %66 = vector.broadcast %65 : vector<1x128xf32> to vector<8x128xf32>
    %67 = arith.addf %64, %66 : vector<8x128xf32>
    %68 = vector.extract_strided_slice %67 {offsets = [0, 0], sizes = [8, 8], strides = [1, 1]} : vector<8x128xf32> to vector<8x8xf32>
    %c0_20 = arith.constant 0 : index
    %c0_21 = arith.constant 0 : index
    %69 = vector.load %arg4[%c0_20, %c0_21] : memref<8x8xf32, #tpu.memory_space<vmem>>, vector<8x8xf32>
    tpu.vector_store %arg4[%c0_20, %c0_21], %68 {strides = array<i32>} : memref<8x8xf32, #tpu.memory_space<vmem>>, vector<8x8xf32>,
    return
  }
  func.func @transform_0(%arg0: i32) -> (i32, i32) {
    %c0_i32 = arith.constant 0 : i32
    %c0_i32_0 = arith.constant 0 : i32
    return %arg0, %c0_i32 : i32, i32
  }
  func.func @transform_1(%arg0: i32) -> (i32, i32) {
    %c0_i32 = arith.constant 0 : i32
    %c0_i32_0 = arith.constant 0 : i32
    %c0_i32_1 = arith.constant 0 : i32
    return %c0_i32, %c0_i32_0 : i32, i32
  }
  func.func @transform_2(%arg0: i32) -> (i32, i32) {
    %c0_i32 = arith.constant 0 : i32
    %c0_i32_0 = arith.constant 0 : i32
    %c0_i32_1 = arith.constant 0 : i32
    return %c0_i32, %c0_i32_0 : i32, i32
  }
  func.func @transform_3(%arg0: i32) -> (i32, i32) {
    %c0_i32 = arith.constant 0 : i32
    %c0_i32_0 = arith.constant 0 : i32
    return %arg0, %c0_i32 : i32, i32
  }
}

</mosaic_0001>

<llo_original>
// kernel: dann_forward.1
$region0: #{dann_forward.1}
  #allocation0 [shape = 'u32[]', space=smem, size = 0x4, offset = 0x4, fixed_abs, tag = 'smem constant byte address 0x4 - core index']
  #allocation1 [shape = 'u32[144,128]{1,0:T(1,128)}', space=vmem, size = 0x12000, scoped, tag = 'internal scratch']
  %s0 = inlined_call_operand.hbm [shape: f32[8,16], index: 0, kind: input, shape index: {}]
  %s1 = inlined_call_operand.hbm [shape: bf16[656,128], index: 1, kind: input, shape index: {}]
  %s2 = inlined_call_operand.hbm [shape: f32[8,128], index: 2, kind: input, shape index: {}]
  %s3 = inlined_call_operand.vmem [shape: f32[8,8], index: 3, kind: output, shape index: {}]
  %s4 = sld [smem:[#allocation0]]
  $region34: #{dann_forward.1} parent=0
    _
  %s6 = ssub.s32 1, %s4
  %s7 = scalar_select 0, %s6, %s4
  $region1: #{dann_forward.1} parent=0
    #allocation2 [shape = 'u8[4096]{0}', space=vmem, size = 0x1000, scoped, tag = 'input window, operand 0, single buffered']
    #allocation3 [shape = 's32[1]{0}', space=sflag, size = 0x4, scoped, tag = 'scoped memory for dann_forward.1']
    #allocation4 [shape = 'u8[167936]{0}', space=vmem, size = 0x29000, scoped, tag = 'input window, operand 1, single buffered']
    #allocation5 [shape = 's32[1]{0}', space=sflag, size = 0x4, scoped, tag = 'scoped memory for dann_forward.1']
    #allocation6 [shape = 'u8[4096]{0}', space=vmem, size = 0x1000, scoped, tag = 'input window, operand 2, single buffered']
    %8 = vsyncpa [#allocation3], 0
    %9 = vsyncpa [#allocation5], 0
    // Predicated region
    $region2: #{dann_forward.1} parent=1 // pred_check
      _
    $region3: #{dann_forward.1} parent=1 // pred_check_branch
      %11 = sbr.rel (0) target = $region5
    $region4: #{dann_forward.1} parent=1 // pred_region
      %s13 = ssub.s32 128, 128
      %14 = vsyncadd [#allocation3], %s13
      %s16 = sshll.u32 [#allocation2], 4
      %s17 = int_to_ptr.vmem [resolvable:$true] %s16
      %19 = dma.hbm_to_vmem [thread:$0]  %s0, 128, %s17, [#allocation3]
    $region5: #{dann_forward.1} parent=1 // pred_fallthru
      _
    // Predicated region
    $region6: #{dann_forward.1} parent=1 // pred_check
      _
    $region7: #{dann_forward.1} parent=1 // pred_check_branch
      %21 = sbr.rel (0) target = $region9
    $region8: #{dann_forward.1} parent=1 // pred_region
      %s23 = ssub.s32 5248, 5248
      %24 = vsyncadd [#allocation5], %s23
      %s25 = sshll.u32 [#allocation4], 4
      %s26 = int_to_ptr.vmem [resolvable:$true] %s25
      %31 = dma.hbm_to_vmem [thread:$0]  %s1, 5248, %s26, [#allocation5], 64, 64, 4
    $region9: #{dann_forward.1} parent=1 // pred_fallthru
      _
    // Predicated region
    $region10: #{dann_forward.1} parent=1 // pred_check
      _
    $region11: #{dann_forward.1} parent=1 // pred_check_branch
      %33 = sbr.rel (0) target = $region13
    $region12: #{dann_forward.1} parent=1 // pred_region
      %s35 = ssub.s32 128, 128
      %36 = vsyncadd [#allocation5], %s35
      %s38 = sshll.u32 [#allocation6], 4
      %s39 = int_to_ptr.vmem [resolvable:$true] %s38
      %41 = dma.hbm_to_vmem [thread:$0]  %s2, 128, %s39, [#allocation5]
    $region13: #{dann_forward.1} parent=1 // pred_fallthru
      _
    // Predicated region
    $region14: #{dann_forward.1} parent=1 // pred_check
      _
    $region15: #{dann_forward.1} parent=1 // pred_check_branch
      %43 = sbr.rel (0) target = $region17
    $region16: #{dann_forward.1} parent=1 // pred_region
      %44 = dma.done [#allocation3], 128
    $region17: #{dann_forward.1} parent=1 // pred_fallthru
      _
    // Predicated region
    $region18: #{dann_forward.1} parent=1 // pred_check
      _
    $region19: #{dann_forward.1} parent=1 // pred_check_branch
      %46 = sbr.rel (0) target = $region21
    $region20: #{dann_forward.1} parent=1 // pred_region
      %47 = dma.done [#allocation5], 5248
    $region21: #{dann_forward.1} parent=1 // pred_fallthru
      _
    // Predicated region
    $region22: #{dann_forward.1} parent=1 // pred_check
      _
    $region23: #{dann_forward.1} parent=1 // pred_check_branch
      %49 = sbr.rel (0) target = $region25
    $region24: #{dann_forward.1} parent=1 // pred_region
      %50 = dma.done [#allocation5], 128
    $region25: #{dann_forward.1} parent=1 // pred_fallthru
      _
    %v52 = vld [vmem:[#allocation6] sm:$0xff]
    %v53 = vld [vmem:[#allocation2] sm:$0xff]
    %v54 = vpack.c.bf16 %v53, %v53
    %v55 = vld [vmem:[#allocation4] sm:$0xf]
    %v56 = vld [vmem:[#allocation4 + $0x4] sm:$0xf]
    %v57 = vlaneseq
    %v58 = vshrl.u32 %v57, 7
    %v59 = vsub.s32 0, %v58
    %v60 = vrot.slane %v52, %v59
    %v63 = vunpack.c.l.b16 %v55
    %v64 = vunpack.c.l.b16 %v56
    %v65 = vpack.c.b16 %v64, %v63
    %vm67 = vcmask 130048
    %v69 = vsel %vm67, %v54, 0
    %71 = vmatprep.subr.bf16.mxu0 0
    %72 = vmatpush1.bf16.msra.mxu0 %v65
    %73 = vmatprep.subr.bf16.mxu0 0
    %74 = vmatpush1.bf16.msra.mxu0 0
    %75 = vmatprep.subr.bf16.mxu0 0
    %76 = vmatpush1.bf16.msra.mxu0 0
    %77 = vmatprep.subr.bf16.mxu0 0
    %78 = vmatpush1.bf16.msra.mxu0 0
    %79 = vmatprep.subr.bf16.mxu0 0
    %80 = vmatpush1.bf16.msra.mxu0 0
    %81 = vmatprep.subr.bf16.mxu0 0
    %82 = vmatpush1.bf16.msra.mxu0 0
    %83 = vmatprep.subr.bf16.mxu0 0
    %84 = vmatpush1.bf16.msra.mxu0 0
    %85 = vmatprep.subr.bf16.mxu0 0
    %86 = vmatpush1.bf16.msra.mxu0 0
    %87 = vmatprep.subr.bf16.mxu0 0
    %88 = vmatpush1.bf16.msra.mxu0 0
    %89 = vmatprep.subr.bf16.mxu0 0
    %90 = vmatpush1.bf16.msra.mxu0 0
    %91 = vmatprep.subr.bf16.mxu0 0
    %92 = vmatpush1.bf16.msra.mxu0 0
    %93 = vmatprep.subr.bf16.mxu0 0
    %94 = vmatpush1.bf16.msra.mxu0 0
    %95 = vmatprep.subr.bf16.mxu0 0
    %96 = vmatpush1.bf16.msra.mxu0 0
    %97 = vmatprep.subr.bf16.mxu0 0
    %98 = vmatpush1.bf16.msra.mxu0 0
    %99 = vmatprep.subr.bf16.mxu0 0
    %100 = vmatpush1.bf16.msra.mxu0 0
    %101 = vmatprep.subr.bf16.mxu0 0
    %102 = vmatpush1.bf16.msra.mxu0 0
    %103 = vmatprep.mubr.bf16.mxu0 0
    %104 = vmatmul.mubr.bf16.gmra.mrb[0].mxu0 %v69
    %v105 = vpop.f32.mrb[0].mxu0
    %v106 = vadd.f32 %v60, %v105
    %v107 = vpop.f32.mrb[0].mxu0
    %v108 = vpop.f32.mrb[0].mxu0
    %v109 = vpop.f32.mrb[0].mxu0
    %110 = vdwg.mxu0
    %v111 = vxor.u32 %v106, 2147483648
    %v112 = vmul.f32 %v111, 1.442695
    %v113 = vpow.pop %v112
    %v114 = vadd.f32 %v113, 1.0
    %v115 = vrcp.pop %v114
    %v116 = vmul.f32 1.0, %v115
    %v117 = vmul.f32 %v106, %v116
    %v118 = vpack.c.bf16 %v117, %v117
    %v119 = vld [vmem:[#allocation4 + $0x8] sm:$0xf]
    %v120 = vld [vmem:[#allocation4 + $0xc] sm:$0xf]
    %v121 = vld [vmem:[#allocation4 + $0x10] sm:$0xf]
    %v122 = vld [vmem:[#allocation4 + $0x14] sm:$0xf]
    %v123 = vld [vmem:[#allocation4 + $0x18] sm:$0xf]
    %v124 = vld [vmem:[#allocation4 + $0x1c] sm:$0xf]
    %v125 = vld [vmem:[#allocation4 + $0x20] sm:$0xf]
    %v126 = vld [vmem:[#allocation4 + $0x24] sm:$0xf]
    %v127 = vld [vmem:[#allocation4 + $0x28] sm:$0xf]
    %v128 = vld [vmem:[#allocation4 + $0x2c] sm:$0xf]
    %v129 = vld [vmem:[#allocation4 + $0x30] sm:$0xf]
    %v130 = vld [vmem:[#allocation4 + $0x34] sm:$0xf]
    %v131 = vld [vmem:[#allocation4 + $0x38] sm:$0xf]
    %v132 = vld [vmem:[#allocation4 + $0x3c] sm:$0xf]
    %v133 = vld [vmem:[#allocation4 + $0x40] sm:$0xf]
    %v134 = vld [vmem:[#allocation4 + $0x44] sm:$0xf]
    %v135 = vlaneseq
    %v136 = vshrl.u32 %v135, 7
    %v137 = vsub.s32 1, %v136
    %v138 = vrot.slane %v52, %v137
    %v155 = vunpack.c.l.b16 %v119
    %v156 = vunpack.c.l.b16 %v120
    %v157 = vunpack.c.l.b16 %v121
    %v158 = vunpack.c.l.b16 %v122
    %v159 = vunpack.c.l.b16 %v123
    %v160 = vunpack.c.l.b16 %v124
    %v161 = vunpack.c.l.b16 %v125
    %v162 = vunpack.c.l.b16 %v126
    %v163 = vunpack.c.l.b16 %v127
    %v164 = vunpack.c.l.b16 %v128
    %v165 = vunpack.c.l.b16 %v129
    %v166 = vunpack.c.l.b16 %v130
    %v167 = vunpack.c.l.b16 %v131
    %v168 = vunpack.c.l.b16 %v132
    %v169 = vunpack.c.l.b16 %v133
    %v170 = vunpack.c.l.b16 %v134
    %v171 = vpack.c.b16 %v156, %v155
    %v172 = vpack.c.b16 %v158, %v157
    %v173 = vpack.c.b16 %v160, %v159
    %v174 = vpack.c.b16 %v162, %v161
    %v175 = vpack.c.b16 %v164, %v163
    %v176 = vpack.c.b16 %v166, %v165
    %v177 = vpack.c.b16 %v168, %v167
    %v178 = vpack.c.b16 %v170, %v169
    %187 = vmatprep.subr.bf16.mxu0 0
    %188 = vmatpush1.bf16.msra.mxu0 %v171
    %189 = vmatprep.subr.bf16.mxu0 0
    %190 = vmatpush1.bf16.msra.mxu0 %v172
    %191 = vmatprep.subr.bf16.mxu0 0
    %192 = vmatpush1.bf16.msra.mxu0 %v173
    %193 = vmatprep.subr.bf16.mxu0 0
    %194 = vmatpush1.bf16.msra.mxu0 %v174
    %195 = vmatprep.subr.bf16.mxu0 0
    %196 = vmatpush1.bf16.msra.mxu0 %v175
    %197 = vmatprep.subr.bf16.mxu0 0
    %198 = vmatpush1.bf16.msra.mxu0 %v176
    %199 = vmatprep.subr.bf16.mxu0 0
    %200 = vmatpush1.bf16.msra.mxu0 %v177
    %201 = vmatprep.subr.bf16.mxu0 0
    %202 = vmatpush1.bf16.msra.mxu0 %v178
    %203 = vmatprep.subr.bf16.mxu0 0
    %204 = vmatpush1.bf16.msra.mxu0 0
    %205 = vmatprep.subr.bf16.mxu0 0
    %206 = vmatpush1.bf16.msra.mxu0 0
    %207 = vmatprep.subr.bf16.mxu0 0
    %208 = vmatpush1.bf16.msra.mxu0 0
    %209 = vmatprep.subr.bf16.mxu0 0
    %210 = vmatpush1.bf16.msra.mxu0 0
    %211 = vmatprep.subr.bf16.mxu0 0
    %212 = vmatpush1.bf16.msra.mxu0 0
    %213 = vmatprep.subr.bf16.mxu0 0
    %214 = vmatpush1.bf16.msra.mxu0 0
    %215 = vmatprep.subr.bf16.mxu0 0
    %216 = vmatpush1.bf16.msra.mxu0 0
    %217 = vmatprep.subr.bf16.mxu0 0
    %218 = vmatpush1.bf16.msra.mxu0 0
    %219 = vmatprep.mubr.bf16.mxu0 0
    %220 = vmatmul.mubr.bf16.gmra.mrb[0].mxu0 %v118
    %v221 = vpop.f32.mrb[0].mxu0
    %v222 = vadd.f32 %v138, %v221
    %v223 = vpop.f32.mrb[0].mxu0
    %v224 = vpop.f32.mrb[0].mxu0
    %v225 = vpop.f32.mrb[0].mxu0
    %226 = vdwg.mxu0
    %v227 = vxor.u32 %v222, 2147483648
    %v228 = vmul.f32 %v227, 1.442695
    %v229 = vpow.pop %v228
    %v230 = vadd.f32 %v229, 1.0
    %v231 = vrcp.pop %v230
    %v232 = vmul.f32 1.0, %v231
    %v233 = vmul.f32 %v222, %v232
    %v234 = vpack.c.bf16 %v233, %v233
    %v235 = vld [vmem:[#allocation4 + $0x48] sm:$0xf]
    %v236 = vld [vmem:[#allocation4 + $0x4c] sm:$0xf]
    %v237 = vld [vmem:[#allocation4 + $0x50] sm:$0xf]
    %v238 = vld [vmem:[#allocation4 + $0x54] sm:$0xf]
    %v239 = vld [vmem:[#allocation4 + $0x58] sm:$0xf]
    %v240 = vld [vmem:[#allocation4 + $0x5c] sm:$0xf]
    %v241 = vld [vmem:[#allocation4 + $0x60] sm:$0xf]
    %v242 = vld [vmem:[#allocation4 + $0x64] sm:$0xf]
    %v243 = vld [vmem:[#allocation4 + $0x68] sm:$0xf]
    %v244 = vld [vmem:[#allocation4 + $0x6c] sm:$0xf]
    %v245 = vld [vmem:[#allocation4 + $0x70] sm:$0xf]
    %v246 = vld [vmem:[#allocation4 + $0x74] sm:$0xf]
    %v247 = vld [vmem:[#allocation4 + $0x78] sm:$0xf]
    %v248 = vld [vmem:[#allocation4 + $0x7c] sm:$0xf]
    %v249 = vld [vmem:[#allocation4 + $0x80] sm:$0xf]
    %v250 = vld [vmem:[#allocation4 + $0x84] sm:$0xf]
    %v251 = vlaneseq
    %v252 = vshrl.u32 %v251, 7
    %v253 = vsub.s32 2, %v252
    %v254 = vrot.slane %v52, %v253
    %v271 = vunpack.c.l.b16 %v235
    %v272 = vunpack.c.l.b16 %v236
    %v273 = vunpack.c.l.b16 %v237
    %v274 = vunpack.c.l.b16 %v238
    %v275 = vunpack.c.l.b16 %v239
    %v276 = vunpack.c.l.b16 %v240
    %v277 = vunpack.c.l.b16 %v241
    %v278 = vunpack.c.l.b16 %v242
    %v279 = vunpack.c.l.b16 %v243
    %v280 = vunpack.c.l.b16 %v244
    %v281 = vunpack.c.l.b16 %v245
    %v282 = vunpack.c.l.b16 %v246
    %v283 = vunpack.c.l.b16 %v247
    %v284 = vunpack.c.l.b16 %v248
    %v285 = vunpack.c.l.b16 %v249
    %v286 = vunpack.c.l.b16 %v250
    %v287 = vpack.c.b16 %v272, %v271
    %v288 = vpack.c.b16 %v274, %v273
    %v289 = vpack.c.b16 %v276, %v275
    %v290 = vpack.c.b16 %v278, %v277
    %v291 = vpack.c.b16 %v280, %v279
    %v292 = vpack.c.b16 %v282, %v281
    %v293 = vpack.c.b16 %v284, %v283
    %v294 = vpack.c.b16 %v286, %v285
    %303 = vmatprep.subr.bf16.mxu0 0
    %304 = vmatpush1.bf16.msra.mxu0 %v287
    %305 = vmatprep.subr.bf16.mxu0 0
    %306 = vmatpush1.bf16.msra.mxu0 %v288
    %307 = vmatprep.subr.bf16.mxu0 0
    %308 = vmatpush1.bf16.msra.mxu0 %v289
    %309 = vmatprep.subr.bf16.mxu0 0
    %310 = vmatpush1.bf16.msra.mxu0 %v290
    %311 = vmatprep.subr.bf16.mxu0 0
    %312 = vmatpush1.bf16.msra.mxu0 %v291
    %313 = vmatprep.subr.bf16.mxu0 0
    %314 = vmatpush1.bf16.msra.mxu0 %v292
    %315 = vmatprep.subr.bf16.mxu0 0
    %316 = vmatpush1.bf16.msra.mxu0 %v293
    %317 = vmatprep.subr.bf16.mxu0 0
    %318 = vmatpush1.bf16.msra.mxu0 %v294
    %319 = vmatprep.subr.bf16.mxu0 0
    %320 = vmatpush1.bf16.msra.mxu0 0
    %321 = vmatprep.subr.bf16.mxu0 0
    %322 = vmatpush1.bf16.msra.mxu0 0
    %323 = vmatprep.subr.bf16.mxu0 0
    %324 = vmatpush1.bf16.msra.mxu0 0
    %325 = vmatprep.subr.bf16.mxu0 0
    %326 = vmatpush1.bf16.msra.mxu0 0
    %327 = vmatprep.subr.bf16.mxu0 0
    %328 = vmatpush1.bf16.msra.mxu0 0
    %329 = vmatprep.subr.bf16.mxu0 0
    %330 = vmatpush1.bf16.msra.mxu0 0
    %331 = vmatprep.subr.bf16.mxu0 0
    %332 = vmatpush1.bf16.msra.mxu0 0
    %333 = vmatprep.subr.bf16.mxu0 0
    %334 = vmatpush1.bf16.msra.mxu0 0
    %335 = vmatprep.mubr.bf16.mxu0 0
    %336 = vmatmul.mubr.bf16.gmra.mrb[0].mxu0 %v234
    %v337 = vpop.f32.mrb[0].mxu0
    %v338 = vadd.f32 %v254, %v337
    %v339 = vpop.f32.mrb[0].mxu0
    %v340 = vpop.f32.mrb[0].mxu0
    %v341 = vpop.f32.mrb[0].mxu0
    %342 = vdwg.mxu0
    %v343 = vxor.u32 %v338, 2147483648
    %v344 = vmul.f32 %v343, 1.442695
    %v345 = vpow.pop %v344
    %v346 = vadd.f32 %v345, 1.0
    %v347 = vrcp.pop %v346
    %v348 = vmul.f32 1.0, %v347
    %v349 = vmul.f32 %v338, %v348
    %v350 = vpack.c.bf16 %v349, %v349
    %v351 = vld [vmem:[#allocation4 + $0x88] sm:$0xf]
    %v352 = vld [vmem:[#allocation4 + $0x8c] sm:$0xf]
    %v353 = vld [vmem:[#allocation4 + $0x90] sm:$0xf]
    %v354 = vld [vmem:[#allocation4 + $0x94] sm:$0xf]
    %v355 = vld [vmem:[#allocation4 + $0x98] sm:$0xf]
    %v356 = vld [vmem:[#allocation4 + $0x9c] sm:$0xf]
    %v357 = vld [vmem:[#allocation4 + $0xa0] sm:$0xf]
    %v358 = vld [vmem:[#allocation4 + $0xa4] sm:$0xf]
    %v359 = vld [vmem:[#allocation4 + $0xa8] sm:$0xf]
    %v360 = vld [vmem:[#allocation4 + $0xac] sm:$0xf]
    %v361 = vld [vmem:[#allocation4 + $0xb0] sm:$0xf]
    %v362 = vld [vmem:[#allocation4 + $0xb4] sm:$0xf]
    %v363 = vld [vmem:[#allocation4 + $0xb8] sm:$0xf]
    %v364 = vld [vmem:[#allocation4 + $0xbc] sm:$0xf]
    %v365 = vld [vmem:[#allocation4 + $0xc0] sm:$0xf]
    %v366 = vld [vmem:[#allocation4 + $0xc4] sm:$0xf]
    %v367 = vlaneseq
    %v368 = vshrl.u32 %v367, 7
    %v369 = vsub.s32 3, %v368
    %v370 = vrot.slane %v52, %v369
    %v387 = vunpack.c.l.b16 %v351
    %v388 = vunpack.c.l.b16 %v352
    %v389 = vunpack.c.l.b16 %v353
    %v390 = vunpack.c.l.b16 %v354
    %v391 = vunpack.c.l.b16 %v355
    %v392 = vunpack.c.l.b16 %v356
    %v393 = vunpack.c.l.b16 %v357
    %v394 = vunpack.c.l.b16 %v358
    %v395 = vunpack.c.l.b16 %v359
    %v396 = vunpack.c.l.b16 %v360
    %v397 = vunpack.c.l.b16 %v361
    %v398 = vunpack.c.l.b16 %v362
    %v399 = vunpack.c.l.b16 %v363
    %v400 = vunpack.c.l.b16 %v364
    %v401 = vunpack.c.l.b16 %v365
    %v402 = vunpack.c.l.b16 %v366
    %v403 = vpack.c.b16 %v388, %v387
    %v404 = vpack.c.b16 %v390, %v389
    %v405 = vpack.c.b16 %v392, %v391
    %v406 = vpack.c.b16 %v394, %v393
    %v407 = vpack.c.b16 %v396, %v395
    %v408 = vpack.c.b16 %v398, %v397
    %v409 = vpack.c.b16 %v400, %v399
    %v410 = vpack.c.b16 %v402, %v401
    %419 = vmatprep.subr.bf16.mxu0 0
    %420 = vmatpush1.bf16.msra.mxu0 %v403
    %421 = vmatprep.subr.bf16.mxu0 0
    %422 = vmatpush1.bf16.msra.mxu0 %v404
    %423 = vmatprep.subr.bf16.mxu0 0
    %424 = vmatpush1.bf16.msra.mxu0 %v405
    %425 = vmatprep.subr.bf16.mxu0 0
    %426 = vmatpush1.bf16.msra.mxu0 %v406
    %427 = vmatprep.subr.bf16.mxu0 0
    %428 = vmatpush1.bf16.msra.mxu0 %v407
    %429 = vmatprep.subr.bf16.mxu0 0
    %430 = vmatpush1.bf16.msra.mxu0 %v408
    %431 = vmatprep.subr.bf16.mxu0 0
    %432 = vmatpush1.bf16.msra.mxu0 %v409
    %433 = vmatprep.subr.bf16.mxu0 0
    %434 = vmatpush1.bf16.msra.mxu0 %v410
    %435 = vmatprep.subr.bf16.mxu0 0
    %436 = vmatpush1.bf16.msra.mxu0 0
    %437 = vmatprep.subr.bf16.mxu0 0
    %438 = vmatpush1.bf16.msra.mxu0 0
    %439 = vmatprep.subr.bf16.mxu0 0
    %440 = vmatpush1.bf16.msra.mxu0 0
    %441 = vmatprep.subr.bf16.mxu0 0
    %442 = vmatpush1.bf16.msra.mxu0 0
    %443 = vmatprep.subr.bf16.mxu0 0
    %444 = vmatpush1.bf16.msra.mxu0 0
    %445 = vmatprep.subr.bf16.mxu0 0
    %446 = vmatpush1.bf16.msra.mxu0 0
    %447 = vmatprep.subr.bf16.mxu0 0
    %448 = vmatpush1.bf16.msra.mxu0 0
    %449 = vmatprep.subr.bf16.mxu0 0
    %450 = vmatpush1.bf16.msra.mxu0 0
    %451 = vmatprep.mubr.bf16.mxu0 0
    %452 = vmatmul.mubr.bf16.gmra.mrb[0].mxu0 %v350
    %v453 = vpop.f32.mrb[0].mxu0
    %v454 = vadd.f32 %v370, %v453
    %v455 = vpop.f32.mrb[0].mxu0
    %v456 = vpop.f32.mrb[0].mxu0
    %v457 = vpop.f32.mrb[0].mxu0
    %458 = vdwg.mxu0
    %v459 = vxor.u32 %v454, 2147483648
    %v460 = vmul.f32 %v459, 1.442695
    %v461 = vpow.pop %v460
    %v462 = vadd.f32 %v461, 1.0
    %v463 = vrcp.pop %v462
    %v464 = vmul.f32 1.0, %v463
    %v465 = vmul.f32 %v454, %v464
    %v466 = vpack.c.bf16 %v465, %v465
    %v467 = vld [vmem:[#allocation4 + $0xc8] sm:$0xf]
    %v468 = vld [vmem:[#allocation4 + $0xcc] sm:$0xf]
    %v469 = vld [vmem:[#allocation4 + $0xd0] sm:$0xf]
    %v470 = vld [vmem:[#allocation4 + $0xd4] sm:$0xf]
    %v471 = vld [vmem:[#allocation4 + $0xd8] sm:$0xf]
    %v472 = vld [vmem:[#allocation4 + $0xdc] sm:$0xf]
    %v473 = vld [vmem:[#allocation4 + $0xe0] sm:$0xf]
    %v474 = vld [vmem:[#allocation4 + $0xe4] sm:$0xf]
    %v475 = vld [vmem:[#allocation4 + $0xe8] sm:$0xf]
    %v476 = vld [vmem:[#allocation4 + $0xec] sm:$0xf]
    %v477 = vld [vmem:[#allocation4 + $0xf0] sm:$0xf]
    %v478 = vld [vmem:[#allocation4 + $0xf4] sm:$0xf]
    %v479 = vld [vmem:[#allocation4 + $0xf8] sm:$0xf]
    %v480 = vld [vmem:[#allocation4 + $0xfc] sm:$0xf]
    %v481 = vld [vmem:[#allocation4 + $0x100] sm:$0xf]
    %v482 = vld [vmem:[#allocation4 + $0x104] sm:$0xf]
    %v483 = vlaneseq
    %v484 = vshrl.u32 %v483, 7
    %v485 = vsub.s32 4, %v484
    %v486 = vrot.slane %v52, %v485
    %v503 = vunpack.c.l.b16 %v467
    %v504 = vunpack.c.l.b16 %v468
    %v505 = vunpack.c.l.b16 %v469
    %v506 = vunpack.c.l.b16 %v470
    %v507 = vunpack.c.l.b16 %v471
    %v508 = vunpack.c.l.b16 %v472
    %v509 = vunpack.c.l.b16 %v473
    %v510 = vunpack.c.l.b16 %v474
    %v511 = vunpack.c.l.b16 %v475
    %v512 = vunpack.c.l.b16 %v476
    %v513 = vunpack.c.l.b16 %v477
    %v514 = vunpack.c.l.b16 %v478
    %v515 = vunpack.c.l.b16 %v479
    %v516 = vunpack.c.l.b16 %v480
    %v517 = vunpack.c.l.b16 %v481
    %v518 = vunpack.c.l.b16 %v482
    %v519 = vpack.c.b16 %v504, %v503
    %v520 = vpack.c.b16 %v506, %v505
    %v521 = vpack.c.b16 %v508, %v507
    %v522 = vpack.c.b16 %v510, %v509
    %v523 = vpack.c.b16 %v512, %v511
    %v524 = vpack.c.b16 %v514, %v513
    %v525 = vpack.c.b16 %v516, %v515
    %v526 = vpack.c.b16 %v518, %v517
    %535 = vmatprep.subr.bf16.mxu0 0
    %536 = vmatpush1.bf16.msra.mxu0 %v519
    %537 = vmatprep.subr.bf16.mxu0 0
    %538 = vmatpush1.bf16.msra.mxu0 %v520
    %539 = vmatprep.subr.bf16.mxu0 0
    %540 = vmatpush1.bf16.msra.mxu0 %v521
    %541 = vmatprep.subr.bf16.mxu0 0
    %542 = vmatpush1.bf16.msra.mxu0 %v522
    %543 = vmatprep.subr.bf16.mxu0 0
    %544 = vmatpush1.bf16.msra.mxu0 %v523
    %545 = vmatprep.subr.bf16.mxu0 0
    %546 = vmatpush1.bf16.msra.mxu0 %v524
    %547 = vmatprep.subr.bf16.mxu0 0
    %548 = vmatpush1.bf16.msra.mxu0 %v525
    %549 = vmatprep.subr.bf16.mxu0 0
    %550 = vmatpush1.bf16.msra.mxu0 %v526
    %551 = vmatprep.subr.bf16.mxu0 0
    %552 = vmatpush1.bf16.msra.mxu0 0
    %553 = vmatprep.subr.bf16.mxu0 0
    %554 = vmatpush1.bf16.msra.mxu0 0
    %555 = vmatprep.subr.bf16.mxu0 0
    %556 = vmatpush1.bf16.msra.mxu0 0
    %557 = vmatprep.subr.bf16.mxu0 0
    %558 = vmatpush1.bf16.msra.mxu0 0
    %559 = vmatprep.subr.bf16.mxu0 0
    %560 = vmatpush1.bf16.msra.mxu0 0
    %561 = vmatprep.subr.bf16.mxu0 0
    %562 = vmatpush1.bf16.msra.mxu0 0
    %563 = vmatprep.subr.bf16.mxu0 0
    %564 = vmatpush1.bf16.msra.mxu0 0
    %565 = vmatprep.subr.bf16.mxu0 0
    %566 = vmatpush1.bf16.msra.mxu0 0
    %567 = vmatprep.mubr.bf16.mxu0 0
    %568 = vmatmul.mubr.bf16.gmra.mrb[0].mxu0 %v466
    %v569 = vpop.f32.mrb[0].mxu0
    %v570 = vadd.f32 %v486, %v569
    %v571 = vpop.f32.mrb[0].mxu0
    %v572 = vpop.f32.mrb[0].mxu0
    %v573 = vpop.f32.mrb[0].mxu0
    %574 = vdwg.mxu0
    %v575 = vxor.u32 %v570, 2147483648
    %v576 = vmul.f32 %v575, 1.442695
    %v577 = vpow.pop %v576
    %v578 = vadd.f32 %v577, 1.0
    %v579 = vrcp.pop %v578
    %v580 = vmul.f32 1.0, %v579
    %v581 = vmul.f32 %v570, %v580
    %v582 = vpack.c.bf16 %v581, %v581
    %v583 = vld [vmem:[#allocation4 + $0x108] sm:$0xf]
    %v584 = vld [vmem:[#allocation4 + $0x10c] sm:$0xf]
    %v585 = vld [vmem:[#allocation4 + $0x110] sm:$0xf]
    %v586 = vld [vmem:[#allocation4 + $0x114] sm:$0xf]
    %v587 = vld [vmem:[#allocation4 + $0x118] sm:$0xf]
    %v588 = vld [vmem:[#allocation4 + $0x11c] sm:$0xf]
    %v589 = vld [vmem:[#allocation4 + $0x120] sm:$0xf]
    %v590 = vld [vmem:[#allocation4 + $0x124] sm:$0xf]
    %v591 = vld [vmem:[#allocation4 + $0x128] sm:$0xf]
    %v592 = vld [vmem:[#allocation4 + $0x12c] sm:$0xf]
    %v593 = vld [vmem:[#allocation4 + $0x130] sm:$0xf]
    %v594 = vld [vmem:[#allocation4 + $0x134] sm:$0xf]
    %v595 = vld [vmem:[#allocation4 + $0x138] sm:$0xf]
    %v596 = vld [vmem:[#allocation4 + $0x13c] sm:$0xf]
    %v597 = vld [vmem:[#allocation4 + $0x140] sm:$0xf]
    %v598 = vld [vmem:[#allocation4 + $0x144] sm:$0xf]
    %v599 = vlaneseq
    %v600 = vshrl.u32 %v599, 7
    %v601 = vsub.s32 5, %v600
    %v602 = vrot.slane %v52, %v601
    %v619 = vunpack.c.l.b16 %v583
    %v620 = vunpack.c.l.b16 %v584
    %v621 = vunpack.c.l.b16 %v585
    %v622 = vunpack.c.l.b16 %v586
    %v623 = vunpack.c.l.b16 %v587
    %v624 = vunpack.c.l.b16 %v588
    %v625 = vunpack.c.l.b16 %v589
    %v626 = vunpack.c.l.b16 %v590
    %v627 = vunpack.c.l.b16 %v591
    %v628 = vunpack.c.l.b16 %v592
    %v629 = vunpack.c.l.b16 %v593
    %v630 = vunpack.c.l.b16 %v594
    %v631 = vunpack.c.l.b16 %v595
    %v632 = vunpack.c.l.b16 %v596
    %v633 = vunpack.c.l.b16 %v597
    %v634 = vunpack.c.l.b16 %v598
    %v635 = vpack.c.b16 %v620, %v619
    %v636 = vpack.c.b16 %v622, %v621
    %v637 = vpack.c.b16 %v624, %v623
    %v638 = vpack.c.b16 %v626, %v625
    %v639 = vpack.c.b16 %v628, %v627
    %v640 = vpack.c.b16 %v630, %v629
    %v641 = vpack.c.b16 %v632, %v631
    %v642 = vpack.c.b16 %v634, %v633
    %651 = vmatprep.subr.bf16.mxu0 0
    %652 = vmatpush1.bf16.msra.mxu0 %v635
    %653 = vmatprep.subr.bf16.mxu0 0
    %654 = vmatpush1.bf16.msra.mxu0 %v636
    %655 = vmatprep.subr.bf16.mxu0 0
    %656 = vmatpush1.bf16.msra.mxu0 %v637
    %657 = vmatprep.subr.bf16.mxu0 0
    %658 = vmatpush1.bf16.msra.mxu0 %v638
    %659 = vmatprep.subr.bf16.mxu0 0
    %660 = vmatpush1.bf16.msra.mxu0 %v639
    %661 = vmatprep.subr.bf16.mxu0 0
    %662 = vmatpush1.bf16.msra.mxu0 %v640
    %663 = vmatprep.subr.bf16.mxu0 0
    %664 = vmatpush1.bf16.msra.mxu0 %v641
    %665 = vmatprep.subr.bf16.mxu0 0
    %666 = vmatpush1.bf16.msra.mxu0 %v642
    %667 = vmatprep.subr.bf16.mxu0 0
    %668 = vmatpush1.bf16.msra.mxu0 0
    %669 = vmatprep.subr.bf16.mxu0 0
    %670 = vmatpush1.bf16.msra.mxu0 0
    %671 = vmatprep.subr.bf16.mxu0 0
    %672 = vmatpush1.bf16.msra.mxu0 0
    %673 = vmatprep.subr.bf16.mxu0 0
    %674 = vmatpush1.bf16.msra.mxu0 0
    %675 = vmatprep.subr.bf16.mxu0 0
    %676 = vmatpush1.bf16.msra.mxu0 0
    %677 = vmatprep.subr.bf16.mxu0 0
    %678 = vmatpush1.bf16.msra.mxu0 0
    %679 = vmatprep.subr.bf16.mxu0 0
    %680 = vmatpush1.bf16.msra.mxu0 0
    %681 = vmatprep.subr.bf16.mxu0 0
    %682 = vmatpush1.bf16.msra.mxu0 0
    %683 = vmatprep.mubr.bf16.mxu0 0
    %684 = vmatmul.mubr.bf16.gmra.mrb[0].mxu0 %v582
    %v685 = vpop.f32.mrb[0].mxu0
    %v686 = vadd.f32 %v602, %v685
    %v687 = vpop.f32.mrb[0].mxu0
    %v688 = vpop.f32.mrb[0].mxu0
    %v689 = vpop.f32.mrb[0].mxu0
    %690 = vdwg.mxu0
    %vm691 = vcmask 64512
    %692 = vst.msk [vmem:[%s3] sm:$0xff] %vm691, %v686
    // Predicated region
    $region26: #{dann_forward.1} parent=1 // pred_check
      _
    $region27: #{dann_forward.1} parent=1 // pred_check_branch
      %694 = sbr.rel (0) target = $region29
    $region28: #{dann_forward.1} parent=1 // pred_region
      _
    $region29: #{dann_forward.1} parent=1 // pred_fallthru
      _
    // Predicated region
    $region30: #{dann_forward.1} parent=1 // pred_check
      _
    $region31: #{dann_forward.1} parent=1 // pred_check_branch
      %696 = sbr.rel (0) target = $region33
    $region32: #{dann_forward.1} parent=1 // pred_region
      _
    $region33: #{dann_forward.1} parent=1 // pred_fallthru
      _
    %697 = vsyncpa [#allocation3], 1
    %698 = vsyncpa [#allocation5], 1

</llo_original>
